<compile_context>
chip_gen: v6e
topology: v6e:2x2x1
jax: 0.10.0
libtpu: 0.0.40
codegen_flags: <defaults>
</compile_context>

<pallas_src>
import functools

import jax
import jax.numpy as jnp
from jax.experimental import pallas as pl
from jax.experimental.pallas import tpu as pltpu


def _round_up(n, m):
    return ((n + m - 1) // m) * m


def dqn_mlp_kernel(x_ref,
                   w1_ref, b1_ref,
                   w2_ref, b2_ref,
                   w3_ref, b3_ref,
                   w4_ref, b4_ref,
                   out_ref):
    # One batch tile per grid step: 4 MXU matmuls + VPU bias/ReLU, all in VMEM.
    x = x_ref[...]

    h = jnp.dot(x, w1_ref[...], preferred_element_type=jnp.float32) + b1_ref[...]
    h = jnp.maximum(h, 0.0)

    h = jnp.dot(h, w2_ref[...], preferred_element_type=jnp.float32) + b2_ref[...]
    h = jnp.maximum(h, 0.0)

    h = jnp.dot(h, w3_ref[...], preferred_element_type=jnp.float32) + b3_ref[...]
    h = jnp.maximum(h, 0.0)

    # w4/b4 are zero-padded to 128 output lanes -> lane-dense (unmasked) store.
    q = jnp.dot(h, w4_ref[...], preferred_element_type=jnp.float32) + b4_ref[...]
    out_ref[...] = q.astype(out_ref.dtype)


@functools.partial(jax.jit, static_argnames=("tile_b",))
def dqn_forward(x, params, *, tile_b=1024):
    """x: [B, state_dim] float32; params: list of (W [in,out], b [1,out])."""
    batch, state_dim = x.shape
    hidden_dim = params[0][0].shape[1]
    action_dim = params[-1][0].shape[1]

    # ---- Lane-dense output: pad final layer's out-features to 128. ----
    out_pad = _round_up(max(action_dim, 128), 128)
    w4, b4 = params[3]
    w4p = jnp.pad(w4, ((0, 0), (0, out_pad - action_dim)))
    b4p = jnp.pad(b4, ((0, 0), (0, out_pad - action_dim)))
    padded_params = [params[0], params[1], params[2], (w4p, b4p)]

    # ---- Batch tiling: TILE_B rows per grid step, multiple of 8 (sublane). ----
    tb = min(tile_b, _round_up(batch, 8))
    tb = _round_up(tb, 8)
    b_pad = _round_up(batch, tb)
    if b_pad != batch:
        x = jnp.pad(x, ((0, b_pad - batch), (0, 0)))
    grid = (b_pad // tb,)

    flat = []
    for w, b in padded_params:
        flat.extend([w, b])

    # x / out: tiled along batch.  Weights/biases: constant block -> DMA'd once
    # and VMEM-resident across all grid steps.
    x_spec = pl.BlockSpec((tb, state_dim), lambda i: (i, 0))
    out_spec = pl.BlockSpec((tb, out_pad), lambda i: (i, 0))
    param_specs = [pl.BlockSpec(a.shape, lambda i: (0, 0)) for a in flat]

    # Advisory cost model so XLA overlaps this call with surrounding graph ops.
    flops = 2 * b_pad * (state_dim * hidden_dim
                         + hidden_dim * hidden_dim * 2
                         + hidden_dim * out_pad)
    param_bytes = sum(a.size * a.dtype.itemsize for a in flat)
    bytes_accessed = (b_pad * state_dim + b_pad * out_pad) * 4 + param_bytes
    cost = pl.CostEstimate(flops=flops, transcendentals=0,
                           bytes_accessed=bytes_accessed)

    out = pl.pallas_call(
        dqn_mlp_kernel,
        out_shape=jax.ShapeDtypeStruct((b_pad, out_pad), jnp.float32),
        grid=grid,
        in_specs=[x_spec] + param_specs,
        out_specs=out_spec,
        compiler_params=pltpu.CompilerParams(
            dimension_semantics=("parallel",)),
        cost_estimate=cost,
    )(x, *flat)

    return out[:batch, :action_dim]


def init_linear(key, fan_in, fan_out):
    # Mimic PyTorch nn.Linear default init: U(-1/sqrt(fan_in), 1/sqrt(fan_in)).
    kw, kb = jax.random.split(key)
    bound = 1.0 / jnp.sqrt(jnp.float32(fan_in))
    w = jax.random.uniform(kw, (fan_in, fan_out), jnp.float32, -bound, bound)
    b = jax.random.uniform(kb, (1, fan_out), jnp.float32, -bound, bound)
    return w, b


if __name__ == "__main__":
    state_dim, action_dim, hidden_dim = 16, 8, 32
    batch = 2

    key = jax.random.PRNGKey(0)
    k_x, k1, k2, k3, k4 = jax.random.split(key, 5)

    x = jax.random.normal(k_x, (batch, state_dim), jnp.float32)
    params = [
        init_linear(k1, state_dim, hidden_dim),
        init_linear(k2, hidden_dim, hidden_dim),
        init_linear(k3, hidden_dim, hidden_dim),
        init_linear(k4, hidden_dim, action_dim),
    ]

    out = dqn_forward(x, params)
    jax.block_until_ready(out)

    # Reference check in plain JAX (f32 end-to-end, so tight tolerance holds).
    ref = x
    for i, (w, b) in enumerate(params):
        ref = ref @ w + b
        if i < len(params) - 1:
            ref = jnp.maximum(ref, 0.0)
    assert out.shape == (batch, action_dim)
    assert jnp.allclose(out, ref, atol=1e-5, rtol=1e-5)

    print("KERNEL_OK")
</pallas_src>

<mosaic_0001>
module attributes {stable_mosaic.version = 11 : i64} {
  func.func @dqn_mlp_kernel(%arg0: i32, %arg1: memref<8x16xf32, #tpu.memory_space<vmem>>, %arg2: memref<16x32xf32, #tpu.memory_space<vmem>>, %arg3: memref<1x32xf32, #tpu.memory_space<vmem>>, %arg4: memref<32x32xf32, #tpu.memory_space<vmem>>, %arg5: memref<1x32xf32, #tpu.memory_space<vmem>>, %arg6: memref<32x32xf32, #tpu.memory_space<vmem>>, %arg7: memref<1x32xf32, #tpu.memory_space<vmem>>, %arg8: memref<32x128xf32, #tpu.memory_space<vmem>>, %arg9: memref<1x128xf32, #tpu.memory_space<vmem>>, %arg10: memref<8x128xf32, #tpu.memory_space<vmem>>) attributes {dimension_semantics = [#tpu.dimension_semantics<parallel>], iteration_bounds = array<i64: 1>, scalar_prefetch = 0 : i64, scratch_operands = 0 : i64, tpu.core_type = #tpu.core_type<tc>, window_params = [{transform_indices = @transform_0, window_bounds = array<i64: 8, 16>}, {pipeline_mode = #tpu.pipeline_mode<synchronous>, transform_indices = @transform_1, window_bounds = array<i64: 16, 32>}, {pipeline_mode = #tpu.pipeline_mode<synchronous>, transform_indices = @transform_2, window_bounds = array<i64: 1, 32>}, {pipeline_mode = #tpu.pipeline_mode<synchronous>, transform_indices = @transform_3, window_bounds = array<i64: 32, 32>}, {pipeline_mode = #tpu.pipeline_mode<synchronous>, transform_indices = @transform_4, window_bounds = array<i64: 1, 32>}, {pipeline_mode = #tpu.pipeline_mode<synchronous>, transform_indices = @transform_5, window_bounds = array<i64: 32, 32>}, {pipeline_mode = #tpu.pipeline_mode<synchronous>, transform_indices = @transform_6, window_bounds = array<i64: 1, 32>}, {pipeline_mode = #tpu.pipeline_mode<synchronous>, transform_indices = @transform_7, window_bounds = array<i64: 32, 128>}, {pipeline_mode = #tpu.pipeline_mode<synchronous>, transform_indices = @transform_8, window_bounds = array<i64: 1, 128>}, {transform_indices = @transform_9, window_bounds = array<i64: 8, 128>}]} {
    %c0 = arith.constant 0 : index
    %c0_0 = arith.constant 0 : index
    %0 = vector.load %arg1[%c0, %c0_0] : memref<8x16xf32, #tpu.memory_space<vmem>>, vector<8x16xf32>
    %c0_1 = arith.constant 0 : index
    %c0_2 = arith.constant 0 : index
    %1 = vector.load %arg2[%c0_1, %c0_2] : memref<16x32xf32, #tpu.memory_space<vmem>>, vector<16x32xf32>
    %cst = arith.constant dense<0.000000e+00> : vector<8x32xf32>
    %2 = tpu.matmul %0, %1, %cst {dimension_numbers = #tpu.dot_dimension_numbers<[1], [0], [0], [1], [0, 0, 1, 1], [], []>} : vector<8x16xf32>, vector<16x32xf32>, vector<8x32xf32> -> vector<8x32xf32>
    %c0_3 = arith.constant 0 : index
    %c0_4 = arith.constant 0 : index
    %3 = vector.load %arg3[%c0_3, %c0_4] : memref<1x32xf32, #tpu.memory_space<vmem>>, vector<1x32xf32>
    %4 = vector.broadcast %3 : vector<1x32xf32> to vector<8x32xf32>
    %5 = arith.addf %2, %4 : vector<8x32xf32>
    %cst_5 = arith.constant 0.000000e+00 : f32
    %6 = vector.broadcast %cst_5 : f32 to vector<8x32xf32>
    %7 = arith.maximumf %5, %6 : vector<8x32xf32>
    %c0_6 = arith.constant 0 : index
    %c0_7 = arith.constant 0 : index
    %8 = vector.load %arg4[%c0_6, %c0_7] : memref<32x32xf32, #tpu.memory_space<vmem>>, vector<32x32xf32>
    %cst_8 = arith.constant dense<0.000000e+00> : vector<8x32xf32>
    %9 = tpu.matmul %7, %8, %cst_8 {dimension_numbers = #tpu.dot_dimension_numbers<[1], [0], [0], [1], [0, 0, 1, 1], [], []>} : vector<8x32xf32>, vector<32x32xf32>, vector<8x32xf32> -> vector<8x32xf32>
    %c0_9 = arith.constant 0 : index
    %c0_10 = arith.constant 0 : index
    %10 = vector.load %arg5[%c0_9, %c0_10] : memref<1x32xf32, #tpu.memory_space<vmem>>, vector<1x32xf32>
    %11 = vector.broadcast %10 : vector<1x32xf32> to vector<8x32xf32>
    %12 = arith.addf %9, %11 : vector<8x32xf32>
    %cst_11 = arith.constant 0.000000e+00 : f32
    %13 = vector.broadcast %cst_11 : f32 to vector<8x32xf32>
    %14 = arith.maximumf %12, %13 : vector<8x32xf32>
    %c0_12 = arith.constant 0 : index
    %c0_13 = arith.constant 0 : index
    %15 = vector.load %arg6[%c0_12, %c0_13] : memref<32x32xf32, #tpu.memory_space<vmem>>, vector<32x32xf32>
    %cst_14 = arith.constant dense<0.000000e+00> : vector<8x32xf32>
    %16 = tpu.matmul %14, %15, %cst_14 {dimension_numbers = #tpu.dot_dimension_numbers<[1], [0], [0], [1], [0, 0, 1, 1], [], []>} : vector<8x32xf32>, vector<32x32xf32>, vector<8x32xf32> -> vector<8x32xf32>
    %c0_15 = arith.constant 0 : index
    %c0_16 = arith.constant 0 : index
    %17 = vector.load %arg7[%c0_15, %c0_16] : memref<1x32xf32, #tpu.memory_space<vmem>>, vector<1x32xf32>
    %18 = vector.broadcast %17 : vector<1x32xf32> to vector<8x32xf32>
    %19 = arith.addf %16, %18 : vector<8x32xf32>
    %cst_17 = arith.constant 0.000000e+00 : f32
    %20 = vector.broadcast %cst_17 : f32 to vector<8x32xf32>
    %21 = arith.maximumf %19, %20 : vector<8x32xf32>
    %c0_18 = arith.constant 0 : index
    %c0_19 = arith.constant 0 : index
    %22 = vector.load %arg8[%c0_18, %c0_19] : memref<32x128xf32, #tpu.memory_space<vmem>>, vector<32x128xf32>
    %cst_20 = arith.constant dense<0.000000e+00> : vector<8x128xf32>
    %23 = tpu.matmul %21, %22, %cst_20 {dimension_numbers = #tpu.dot_dimension_numbers<[1], [0], [0], [1], [0, 0, 1, 1], [], []>} : vector<8x32xf32>, vector<32x128xf32>, vector<8x128xf32> -> vector<8x128xf32>
    %c0_21 = arith.constant 0 : index
    %c0_22 = arith.constant 0 : index
    %24 = vector.load %arg9[%c0_21, %c0_22] : memref<1x128xf32, #tpu.memory_space<vmem>>, vector<1x128xf32>
    %25 = vector.broadcast %24 : vector<1x128xf32> to vector<8x128xf32>
    %26 = arith.addf %23, %25 : vector<8x128xf32>
    %c0_23 = arith.constant 0 : index
    %c0_24 = arith.constant 0 : index
    %27 = vector.load %arg10[%c0_23, %c0_24] : memref<8x128xf32, #tpu.memory_space<vmem>>, vector<8x128xf32>
    tpu.vector_store %arg10[%c0_23, %c0_24], %26 {strides = array<i32>} : memref<8x128xf32, #tpu.memory_space<vmem>>, vector<8x128xf32>,
    return
  }
  func.func @transform_0(%arg0: i32) -> (i32, i32) {
    %c0_i32 = arith.constant 0 : i32
    %c0_i32_0 = arith.constant 0 : i32
    return %arg0, %c0_i32 : i32, i32
  }
  func.func @transform_1(%arg0: i32) -> (i32, i32) {
    %c0_i32 = arith.constant 0 : i32
    %c0_i32_0 = arith.constant 0 : i32
    %c0_i32_1 = arith.constant 0 : i32
    return %c0_i32, %c0_i32_0 : i32, i32
  }
  func.func @transform_2(%arg0: i32) -> (i32, i32) {
    %c0_i32 = arith.constant 0 : i32
    %c0_i32_0 = arith.constant 0 : i32
    %c0_i32_1 = arith.constant 0 : i32
    return %c0_i32, %c0_i32_0 : i32, i32
  }
  func.func @transform_3(%arg0: i32) -> (i32, i32) {
    %c0_i32 = arith.constant 0 : i32
    %c0_i32_0 = arith.constant 0 : i32
    %c0_i32_1 = arith.constant 0 : i32
    return %c0_i32, %c0_i32_0 : i32, i32
  }
  func.func @transform_4(%arg0: i32) -> (i32, i32) {
    %c0_i32 = arith.constant 0 : i32
    %c0_i32_0 = arith.constant 0 : i32
    %c0_i32_1 = arith.constant 0 : i32
    return %c0_i32, %c0_i32_0 : i32, i32
  }
  func.func @transform_5(%arg0: i32) -> (i32, i32) {
    %c0_i32 = arith.constant 0 : i32
    %c0_i32_0 = arith.constant 0 : i32
    %c0_i32_1 = arith.constant 0 : i32
    return %c0_i32, %c0_i32_0 : i32, i32
  }
  func.func @transform_6(%arg0: i32) -> (i32, i32) {
    %c0_i32 = arith.constant 0 : i32
    %c0_i32_0 = arith.constant 0 : i32
    %c0_i32_1 = arith.constant 0 : i32
    return %c0_i32, %c0_i32_0 : i32, i32
  }
  func.func @transform_7(%arg0: i32) -> (i32, i32) {
    %c0_i32 = arith.constant 0 : i32
    %c0_i32_0 = arith.constant 0 : i32
    %c0_i32_1 = arith.constant 0 : i32
    return %c0_i32, %c0_i32_0 : i32, i32
  }
  func.func @transform_8(%arg0: i32) -> (i32, i32) {
    %c0_i32 = arith.constant 0 : i32
    %c0_i32_0 = arith.constant 0 : i32
    %c0_i32_1 = arith.constant 0 : i32
    return %c0_i32, %c0_i32_0 : i32, i32
  }
  func.func @transform_9(%arg0: i32) -> (i32, i32) {
    %c0_i32 = arith.constant 0 : i32
    %c0_i32_0 = arith.constant 0 : i32
    return %arg0, %c0_i32 : i32, i32
  }
}

</mosaic_0001>

<llo_original>
// kernel: dqn_forward.1
$region0: #{dqn_forward.1}
  #allocation0 [shape = 'u32[]', space=smem, size = 0x4, offset = 0x4, fixed_abs, tag = 'smem constant byte address 0x4 - core index']
  #allocation1 [shape = 'u32[144,128]{1,0:T(1,128)}', space=vmem, size = 0x12000, scoped, tag = 'internal scratch']
  %s0 = inlined_call_operand.vmem [shape: f32[8,16], index: 0, kind: input, shape index: {}]
  %s1 = inlined_call_operand.vmem [shape: f32[16,32], index: 1, kind: input, shape index: {}]
  %s2 = inlined_call_operand.vmem [shape: f32[1,32], index: 2, kind: input, shape index: {}]
  %s3 = inlined_call_operand.vmem [shape: f32[32,32], index: 3, kind: input, shape index: {}]
  %s4 = inlined_call_operand.vmem [shape: f32[1,32], index: 4, kind: input, shape index: {}]
  %s5 = inlined_call_operand.vmem [shape: f32[32,32], index: 5, kind: input, shape index: {}]
  %s6 = inlined_call_operand.vmem [shape: f32[1,32], index: 6, kind: input, shape index: {}]
  %s7 = inlined_call_operand.vmem [shape: f32[32,128], index: 7, kind: input, shape index: {}]
  %s8 = inlined_call_operand.vmem [shape: f32[1,128], index: 8, kind: input, shape index: {}]
  %s9 = inlined_call_operand.vmem [shape: f32[8,128], index: 9, kind: output, shape index: {}]
  %s10 = sld [smem:[#allocation0]]
  $region46: #{dqn_forward.1} parent=0
    _
  %s12 = ssub.s32 1, %s10
  %s13 = scalar_select 0, %s12, %s10
  // Predicated region
  $region2: #{dqn_forward.1} parent=0 // pred_check
    _
  $region3: #{dqn_forward.1} parent=0 // pred_check_branch
    %15 = sbr.rel (0) target = $region5
  $region4: #{dqn_forward.1} parent=0 // pred_region
    _
  $region5: #{dqn_forward.1} parent=0 // pred_fallthru
    _
  // Predicated region
  $region6: #{dqn_forward.1} parent=0 // pred_check
    _
  $region7: #{dqn_forward.1} parent=0 // pred_check_branch
    %17 = sbr.rel (0) target = $region9
  $region8: #{dqn_forward.1} parent=0 // pred_region
    _
  $region9: #{dqn_forward.1} parent=0 // pred_fallthru
    _
  // Predicated region
  $region10: #{dqn_forward.1} parent=0 // pred_check
    _
  $region11: #{dqn_forward.1} parent=0 // pred_check_branch
    %19 = sbr.rel (0) target = $region13
  $region12: #{dqn_forward.1} parent=0 // pred_region
    _
  $region13: #{dqn_forward.1} parent=0 // pred_fallthru
    _
  // Predicated region
  $region14: #{dqn_forward.1} parent=0 // pred_check
    _
  $region15: #{dqn_forward.1} parent=0 // pred_check_branch
    %21 = sbr.rel (0) target = $region17
  $region16: #{dqn_forward.1} parent=0 // pred_region
    _
  $region17: #{dqn_forward.1} parent=0 // pred_fallthru
    _
  // Predicated region
  $region18: #{dqn_forward.1} parent=0 // pred_check
    _
  $region19: #{dqn_forward.1} parent=0 // pred_check_branch
    %23 = sbr.rel (0) target = $region21
  $region20: #{dqn_forward.1} parent=0 // pred_region
    _
  $region21: #{dqn_forward.1} parent=0 // pred_fallthru
    _
  // Predicated region
  $region22: #{dqn_forward.1} parent=0 // pred_check
    _
  $region23: #{dqn_forward.1} parent=0 // pred_check_branch
    %25 = sbr.rel (0) target = $region25
  $region24: #{dqn_forward.1} parent=0 // pred_region
    _
  $region25: #{dqn_forward.1} parent=0 // pred_fallthru
    _
  // Predicated region
  $region26: #{dqn_forward.1} parent=0 // pred_check
    _
  $region27: #{dqn_forward.1} parent=0 // pred_check_branch
    %27 = sbr.rel (0) target = $region29
  $region28: #{dqn_forward.1} parent=0 // pred_region
    _
  $region29: #{dqn_forward.1} parent=0 // pred_fallthru
    _
  // Predicated region
  $region30: #{dqn_forward.1} parent=0 // pred_check
    _
  $region31: #{dqn_forward.1} parent=0 // pred_check_branch
    %29 = sbr.rel (0) target = $region33
  $region32: #{dqn_forward.1} parent=0 // pred_region
    _
  $region33: #{dqn_forward.1} parent=0 // pred_fallthru
    _
  // Predicated region
  $region34: #{dqn_forward.1} parent=0 // pred_check
    _
  $region35: #{dqn_forward.1} parent=0 // pred_check_branch
    %31 = sbr.rel (0) target = $region37
  $region36: #{dqn_forward.1} parent=0 // pred_region
    _
  $region37: #{dqn_forward.1} parent=0 // pred_fallthru
    _
  %v32 = vld [vmem:[%s0] sm:$0xff]
  %v33 = vld [vmem:[%s1] sm:$0xff]
  %v34 = vld [vmem:[%s1 + $0x8] sm:$0xff]
  %v35 = vld [vmem:[%s2] sm:$0x1]
  %v37 = vlaneseq
  %v38 = vshrl.u32 %v37, 7
  %v39 = vsub.s32 0, %v38
  %v40 = vrot.slane %v35, %v39
  %vm42 = vcmask 130048
  %v44 = vsel %vm42, %v32, 0
  %46 = vmatprep.subr.mxu0 0.0
  %47 = vmatpush1.msra.mxu0 0.0
  %48 = vmatprep.subr.mxu0 0.0
  %49 = vmatpush1.msra.mxu0 0.0
  %50 = vmatprep.subr.mxu0 0.0
  %51 = vmatpush1.msra.mxu0 0.0
  %52 = vmatprep.subr.mxu0 0.0
  %53 = vmatpush1.msra.mxu0 0.0
  %54 = vmatprep.subr.mxu0 0.0
  %55 = vmatpush1.msra.mxu0 0.0
  %56 = vmatprep.subr.mxu0 0.0
  %57 = vmatpush1.msra.mxu0 0.0
  %58 = vmatprep.subr.mxu0 0.0
  %59 = vmatpush1.msra.mxu0 0.0
  %60 = vmatprep.subr.mxu0 0.0
  %61 = vmatpush1.msra.mxu0 0.0
  %62 = vmatprep.subr.mxu0 0.0
  %63 = vmatpush1.msra.mxu0 0.0
  %64 = vmatprep.subr.mxu0 0.0
  %65 = vmatpush1.msra.mxu0 0.0
  %66 = vmatprep.subr.mxu0 0.0
  %67 = vmatpush1.msra.mxu0 0.0
  %68 = vmatprep.subr.mxu0 0.0
  %69 = vmatpush1.msra.mxu0 0.0
  %70 = vmatprep.subr.mxu0 0.0
  %71 = vmatpush1.msra.mxu0 0.0
  %72 = vmatprep.subr.mxu0 0.0
  %73 = vmatpush1.msra.mxu0 0.0
  %74 = vmatprep.subr.mxu0 0.0
  %75 = vmatpush1.msra.mxu0 %v34
  %76 = vmatprep.subr.mxu0 0.0
  %77 = vmatpush1.msra.mxu0 %v33
  %78 = vmatprep.subr.mxu0 0.0
  %79 = vmatpush2.msra.mxu0 0.0
  %80 = vmatprep.subr.mxu0 0.0
  %81 = vmatpush2.msra.mxu0 0.0
  %82 = vmatprep.subr.mxu0 0.0
  %83 = vmatpush2.msra.mxu0 0.0
  %84 = vmatprep.subr.mxu0 0.0
  %85 = vmatpush2.msra.mxu0 0.0
  %86 = vmatprep.subr.mxu0 0.0
  %87 = vmatpush2.msra.mxu0 0.0
  %88 = vmatprep.subr.mxu0 0.0
  %89 = vmatpush2.msra.mxu0 0.0
  %90 = vmatprep.subr.mxu0 0.0
  %91 = vmatpush2.msra.mxu0 0.0
  %92 = vmatprep.subr.mxu0 0.0
  %93 = vmatpush2.msra.mxu0 0.0
  %94 = vmatprep.subr.mxu0 0.0
  %95 = vmatpush2.msra.mxu0 0.0
  %96 = vmatprep.subr.mxu0 0.0
  %97 = vmatpush2.msra.mxu0 0.0
  %98 = vmatprep.subr.mxu0 0.0
  %99 = vmatpush2.msra.mxu0 0.0
  %100 = vmatprep.subr.mxu0 0.0
  %101 = vmatpush2.msra.mxu0 0.0
  %102 = vmatprep.subr.mxu0 0.0
  %103 = vmatpush2.msra.mxu0 0.0
  %104 = vmatprep.subr.mxu0 0.0
  %105 = vmatpush2.msra.mxu0 0.0
  %106 = vmatprep.subr.mxu0 0.0
  %107 = vmatpush2.msra.mxu0 0.0
  %108 = vmatprep.subr.mxu0 0.0
  %109 = vmatpush2.msra.mxu0 0.0
  %110 = vmatprep.mubr.f32.mxu0 0.0
  %111 = vmatmul.mubr.f32.gmra.mxu0 %v44
  %v112 = vpop.f32.mrf.mxu0
  %v113 = vadd.f32 %v40, %v112
  %v114 = vpop.f32.mrf.mxu0
  %115 = vdwg.mxu0
  %v116 = vmax.f32 %v113, 0.0
  %v117 = vld [vmem:[%s3] sm:$0xff]
  %v118 = vld [vmem:[%s3 + $0x8] sm:$0xff]
  %v119 = vld [vmem:[%s3 + $0x10] sm:$0xff]
  %v120 = vld [vmem:[%s3 + $0x18] sm:$0xff]
  %v121 = vld [vmem:[%s4] sm:$0x1]
  %v123 = vlaneseq
  %v124 = vshrl.u32 %v123, 7
  %v125 = vsub.s32 0, %v124
  %v126 = vrot.slane %v121, %v125
  %vm128 = vcmask 261120
  %v130 = vsel %vm128, %v116, 0
  %132 = vmatprep.subr.mxu0 0.0
  %133 = vmatpush1.msra.mxu0 0.0
  %134 = vmatprep.subr.mxu0 0.0
  %135 = vmatpush1.msra.mxu0 0.0
  %136 = vmatprep.subr.mxu0 0.0
  %137 = vmatpush1.msra.mxu0 0.0
  %138 = vmatprep.subr.mxu0 0.0
  %139 = vmatpush1.msra.mxu0 0.0
  %140 = vmatprep.subr.mxu0 0.0
  %141 = vmatpush1.msra.mxu0 0.0
  %142 = vmatprep.subr.mxu0 0.0
  %143 = vmatpush1.msra.mxu0 0.0
  %144 = vmatprep.subr.mxu0 0.0
  %145 = vmatpush1.msra.mxu0 0.0
  %146 = vmatprep.subr.mxu0 0.0
  %147 = vmatpush1.msra.mxu0 0.0
  %148 = vmatprep.subr.mxu0 0.0
  %149 = vmatpush1.msra.mxu0 0.0
  %150 = vmatprep.subr.mxu0 0.0
  %151 = vmatpush1.msra.mxu0 0.0
  %152 = vmatprep.subr.mxu0 0.0
  %153 = vmatpush1.msra.mxu0 0.0
  %154 = vmatprep.subr.mxu0 0.0
  %155 = vmatpush1.msra.mxu0 0.0
  %156 = vmatprep.subr.mxu0 0.0
  %157 = vmatpush1.msra.mxu0 %v120
  %158 = vmatprep.subr.mxu0 0.0
  %159 = vmatpush1.msra.mxu0 %v119
  %160 = vmatprep.subr.mxu0 0.0
  %161 = vmatpush1.msra.mxu0 %v118
  %162 = vmatprep.subr.mxu0 0.0
  %163 = vmatpush1.msra.mxu0 %v117
  %164 = vmatprep.subr.mxu0 0.0
  %165 = vmatpush2.msra.mxu0 0.0
  %166 = vmatprep.subr.mxu0 0.0
  %167 = vmatpush2.msra.mxu0 0.0
  %168 = vmatprep.subr.mxu0 0.0
  %169 = vmatpush2.msra.mxu0 0.0
  %170 = vmatprep.subr.mxu0 0.0
  %171 = vmatpush2.msra.mxu0 0.0
  %172 = vmatprep.subr.mxu0 0.0
  %173 = vmatpush2.msra.mxu0 0.0
  %174 = vmatprep.subr.mxu0 0.0
  %175 = vmatpush2.msra.mxu0 0.0
  %176 = vmatprep.subr.mxu0 0.0
  %177 = vmatpush2.msra.mxu0 0.0
  %178 = vmatprep.subr.mxu0 0.0
  %179 = vmatpush2.msra.mxu0 0.0
  %180 = vmatprep.subr.mxu0 0.0
  %181 = vmatpush2.msra.mxu0 0.0
  %182 = vmatprep.subr.mxu0 0.0
  %183 = vmatpush2.msra.mxu0 0.0
  %184 = vmatprep.subr.mxu0 0.0
  %185 = vmatpush2.msra.mxu0 0.0
  %186 = vmatprep.subr.mxu0 0.0
  %187 = vmatpush2.msra.mxu0 0.0
  %188 = vmatprep.subr.mxu0 0.0
  %189 = vmatpush2.msra.mxu0 0.0
  %190 = vmatprep.subr.mxu0 0.0
  %191 = vmatpush2.msra.mxu0 0.0
  %192 = vmatprep.subr.mxu0 0.0
  %193 = vmatpush2.msra.mxu0 0.0
  %194 = vmatprep.subr.mxu0 0.0
  %195 = vmatpush2.msra.mxu0 0.0
  %196 = vmatprep.mubr.f32.mxu0 0.0
  %197 = vmatmul.mubr.f32.gmra.mxu0 %v130
  %v198 = vpop.f32.mrf.mxu0
  %v199 = vadd.f32 %v126, %v198
  %v200 = vpop.f32.mrf.mxu0
  %201 = vdwg.mxu0
  %v202 = vmax.f32 %v199, 0.0
  %v203 = vld [vmem:[%s5] sm:$0xff]
  %v204 = vld [vmem:[%s5 + $0x8] sm:$0xff]
  %v205 = vld [vmem:[%s5 + $0x10] sm:$0xff]
  %v206 = vld [vmem:[%s5 + $0x18] sm:$0xff]
  %v207 = vld [vmem:[%s6] sm:$0x1]
  %v209 = vlaneseq
  %v210 = vshrl.u32 %v209, 7
  %v211 = vsub.s32 0, %v210
  %v212 = vrot.slane %v207, %v211
  %v215 = vsel %vm128, %v202, 0
  %217 = vmatprep.subr.mxu0 0.0
  %218 = vmatpush1.msra.mxu0 0.0
  %219 = vmatprep.subr.mxu0 0.0
  %220 = vmatpush1.msra.mxu0 0.0
  %221 = vmatprep.subr.mxu0 0.0
  %222 = vmatpush1.msra.mxu0 0.0
  %223 = vmatprep.subr.mxu0 0.0
  %224 = vmatpush1.msra.mxu0 0.0
  %225 = vmatprep.subr.mxu0 0.0
  %226 = vmatpush1.msra.mxu0 0.0
  %227 = vmatprep.subr.mxu0 0.0
  %228 = vmatpush1.msra.mxu0 0.0
  %229 = vmatprep.subr.mxu0 0.0
  %230 = vmatpush1.msra.mxu0 0.0
  %231 = vmatprep.subr.mxu0 0.0
  %232 = vmatpush1.msra.mxu0 0.0
  %233 = vmatprep.subr.mxu0 0.0
  %234 = vmatpush1.msra.mxu0 0.0
  %235 = vmatprep.subr.mxu0 0.0
  %236 = vmatpush1.msra.mxu0 0.0
  %237 = vmatprep.subr.mxu0 0.0
  %238 = vmatpush1.msra.mxu0 0.0
  %239 = vmatprep.subr.mxu0 0.0
  %240 = vmatpush1.msra.mxu0 0.0
  %241 = vmatprep.subr.mxu0 0.0
  %242 = vmatpush1.msra.mxu0 %v206
  %243 = vmatprep.subr.mxu0 0.0
  %244 = vmatpush1.msra.mxu0 %v205
  %245 = vmatprep.subr.mxu0 0.0
  %246 = vmatpush1.msra.mxu0 %v204
  %247 = vmatprep.subr.mxu0 0.0
  %248 = vmatpush1.msra.mxu0 %v203
  %249 = vmatprep.subr.mxu0 0.0
  %250 = vmatpush2.msra.mxu0 0.0
  %251 = vmatprep.subr.mxu0 0.0
  %252 = vmatpush2.msra.mxu0 0.0
  %253 = vmatprep.subr.mxu0 0.0
  %254 = vmatpush2.msra.mxu0 0.0
  %255 = vmatprep.subr.mxu0 0.0
  %256 = vmatpush2.msra.mxu0 0.0
  %257 = vmatprep.subr.mxu0 0.0
  %258 = vmatpush2.msra.mxu0 0.0
  %259 = vmatprep.subr.mxu0 0.0
  %260 = vmatpush2.msra.mxu0 0.0
  %261 = vmatprep.subr.mxu0 0.0
  %262 = vmatpush2.msra.mxu0 0.0
  %263 = vmatprep.subr.mxu0 0.0
  %264 = vmatpush2.msra.mxu0 0.0
  %265 = vmatprep.subr.mxu0 0.0
  %266 = vmatpush2.msra.mxu0 0.0
  %267 = vmatprep.subr.mxu0 0.0
  %268 = vmatpush2.msra.mxu0 0.0
  %269 = vmatprep.subr.mxu0 0.0
  %270 = vmatpush2.msra.mxu0 0.0
  %271 = vmatprep.subr.mxu0 0.0
  %272 = vmatpush2.msra.mxu0 0.0
  %273 = vmatprep.subr.mxu0 0.0
  %274 = vmatpush2.msra.mxu0 0.0
  %275 = vmatprep.subr.mxu0 0.0
  %276 = vmatpush2.msra.mxu0 0.0
  %277 = vmatprep.subr.mxu0 0.0
  %278 = vmatpush2.msra.mxu0 0.0
  %279 = vmatprep.subr.mxu0 0.0
  %280 = vmatpush2.msra.mxu0 0.0
  %281 = vmatprep.mubr.f32.mxu0 0.0
  %282 = vmatmul.mubr.f32.gmra.mxu0 %v215
  %v283 = vpop.f32.mrf.mxu0
  %v284 = vadd.f32 %v212, %v283
  %v285 = vpop.f32.mrf.mxu0
  %286 = vdwg.mxu0
  %v287 = vmax.f32 %v284, 0.0
  %v288 = vld [vmem:[%s7] sm:$0xff]
  %v289 = vld [vmem:[%s7 + $0x8] sm:$0xff]
  %v290 = vld [vmem:[%s7 + $0x10] sm:$0xff]
  %v291 = vld [vmem:[%s7 + $0x18] sm:$0xff]
  %v292 = vld [vmem:[%s8] sm:$0x1]
  %v294 = vlaneseq
  %v295 = vshrl.u32 %v294, 7
  %v296 = vsub.s32 0, %v295
  %v297 = vrot.slane %v292, %v296
  %v300 = vsel %vm128, %v287, 0
  %302 = vmatprep.subr.mxu0 0.0
  %303 = vmatpush1.msra.mxu0 0.0
  %304 = vmatprep.subr.mxu0 0.0
  %305 = vmatpush1.msra.mxu0 0.0
  %306 = vmatprep.subr.mxu0 0.0
  %307 = vmatpush1.msra.mxu0 0.0
  %308 = vmatprep.subr.mxu0 0.0
  %309 = vmatpush1.msra.mxu0 0.0
  %310 = vmatprep.subr.mxu0 0.0
  %311 = vmatpush1.msra.mxu0 0.0
  %312 = vmatprep.subr.mxu0 0.0
  %313 = vmatpush1.msra.mxu0 0.0
  %314 = vmatprep.subr.mxu0 0.0
  %315 = vmatpush1.msra.mxu0 0.0
  %316 = vmatprep.subr.mxu0 0.0
  %317 = vmatpush1.msra.mxu0 0.0
  %318 = vmatprep.subr.mxu0 0.0
  %319 = vmatpush1.msra.mxu0 0.0
  %320 = vmatprep.subr.mxu0 0.0
  %321 = vmatpush1.msra.mxu0 0.0
  %322 = vmatprep.subr.mxu0 0.0
  %323 = vmatpush1.msra.mxu0 0.0
  %324 = vmatprep.subr.mxu0 0.0
  %325 = vmatpush1.msra.mxu0 0.0
  %326 = vmatprep.subr.mxu0 0.0
  %327 = vmatpush1.msra.mxu0 %v291
  %328 = vmatprep.subr.mxu0 0.0
  %329 = vmatpush1.msra.mxu0 %v290
  %330 = vmatprep.subr.mxu0 0.0
  %331 = vmatpush1.msra.mxu0 %v289
  %332 = vmatprep.subr.mxu0 0.0
  %333 = vmatpush1.msra.mxu0 %v288
  %334 = vmatprep.subr.mxu0 0.0
  %335 = vmatpush2.msra.mxu0 0.0
  %336 = vmatprep.subr.mxu0 0.0
  %337 = vmatpush2.msra.mxu0 0.0
  %338 = vmatprep.subr.mxu0 0.0
  %339 = vmatpush2.msra.mxu0 0.0
  %340 = vmatprep.subr.mxu0 0.0
  %341 = vmatpush2.msra.mxu0 0.0
  %342 = vmatprep.subr.mxu0 0.0
  %343 = vmatpush2.msra.mxu0 0.0
  %344 = vmatprep.subr.mxu0 0.0
  %345 = vmatpush2.msra.mxu0 0.0
  %346 = vmatprep.subr.mxu0 0.0
  %347 = vmatpush2.msra.mxu0 0.0
  %348 = vmatprep.subr.mxu0 0.0
  %349 = vmatpush2.msra.mxu0 0.0
  %350 = vmatprep.subr.mxu0 0.0
  %351 = vmatpush2.msra.mxu0 0.0
  %352 = vmatprep.subr.mxu0 0.0
  %353 = vmatpush2.msra.mxu0 0.0
  %354 = vmatprep.subr.mxu0 0.0
  %355 = vmatpush2.msra.mxu0 0.0
  %356 = vmatprep.subr.mxu0 0.0
  %357 = vmatpush2.msra.mxu0 0.0
  %358 = vmatprep.subr.mxu0 0.0
  %359 = vmatpush2.msra.mxu0 0.0
  %360 = vmatprep.subr.mxu0 0.0
  %361 = vmatpush2.msra.mxu0 0.0
  %362 = vmatprep.subr.mxu0 0.0
  %363 = vmatpush2.msra.mxu0 0.0
  %364 = vmatprep.subr.mxu0 0.0
  %365 = vmatpush2.msra.mxu0 0.0
  %366 = vmatprep.mubr.f32.mxu0 0.0
  %367 = vmatmul.mubr.f32.gmra.mxu0 %v300
  %v368 = vpop.f32.mrf.mxu0
  %v369 = vadd.f32 %v297, %v368
  %v370 = vpop.f32.mrf.mxu0
  %371 = vdwg.mxu0
  %372 = vst [vmem:[%s9] sm:$0xff] %v369
  // Predicated region
  $region38: #{dqn_forward.1} parent=0 // pred_check
    _
  $region39: #{dqn_forward.1} parent=0 // pred_check_branch
    %374 = sbr.rel (0) target = $region41
  $region40: #{dqn_forward.1} parent=0 // pred_region
    _
  $region41: #{dqn_forward.1} parent=0 // pred_fallthru
    _
  // Predicated region
  $region42: #{dqn_forward.1} parent=0 // pred_check
    _
  $region43: #{dqn_forward.1} parent=0 // pred_check_branch
    %376 = sbr.rel (0) target = $region45
  $region44: #{dqn_forward.1} parent=0 // pred_region
    _
  $region45: #{dqn_forward.1} parent=0 // pred_fallthru
    _

</llo_original>
